<compile_context>
chip_gen: v6e
topology: v6e:2x2x1
jax: 0.10.0
libtpu: 0.0.40
codegen_flags: <defaults>
</compile_context>

<pallas_src>
import jax
import jax.numpy as jnp
from jax import lax
from jax.experimental import pallas as pl
from jax.experimental.pallas import tpu as pltpu

_EPS = 1e-5

_COMPILER_PARAMS = pltpu.CompilerParams(
    dimension_semantics=("arbitrary",),
    vmem_limit_bytes=32 * 1024 * 1024,
)


def _zero_index_map(nd):
    return lambda i, nd=nd: (0,) * nd


def _full_specs(arrays):
    return [pl.BlockSpec(a.shape, _zero_index_map(a.ndim)) for a in arrays]


def _bn_train(y, g, b):
    """Training-mode BatchNorm over rows: one-pass batch stats (biased variance)."""
    inv_m = 1.0 / y.shape[0]
    s1 = jnp.sum(y, axis=0, keepdims=True)
    s2 = jnp.sum(y * y, axis=0, keepdims=True)
    mean = s1 * inv_m
    var = s2 * inv_m - mean * mean
    return (y - mean) * lax.rsqrt(var + _EPS) * g + b


# ---------------------------------------------------------------------------
# kernel 1: conv1x1 (Cin -> P) + BN1 + ReLU
# ---------------------------------------------------------------------------
def _k1_conv_bn_relu(x_ref, w1_ref, g1_ref, b1_ref, z_ref):
    y0 = jnp.dot(x_ref[...].astype(jnp.bfloat16), w1_ref[...],
                 preferred_element_type=jnp.float32)
    z_ref[...] = jnp.maximum(_bn_train(y0, g1_ref[...], b1_ref[...]), 0.0)


# ---------------------------------------------------------------------------
# kernel 2: strided 3x3 conv + BN2 + ReLU + conv1x1 (P -> 4P) + BN3
#           + shortcut (identity or 1x1 conv + BN) + add + ReLU
# ---------------------------------------------------------------------------
def _make_k2(N, Ho, Wo, P, P4, s, proj):
    M2 = N * Ho * Wo
    nplanes = s * s

    def _conv3x3(plane_refs, w2_ref):
        # Each tap (kh, kw) reads a *contiguous* (Ho, Wo) window of the parity
        # plane (kh % s, kw % s) at offset (kh // s, kw // s): stride handled by
        # the wrapper-side parity decomposition, not by strided loads.
        acc = jnp.zeros((M2, P), jnp.float32)
        for kh in range(3):
            for kw in range(3):
                t = (kh % s) * s + (kw % s)
                oh, ow = kh // s, kw // s
                win = plane_refs[t][:, oh:oh + Ho, ow:ow + Wo, :]       # (N,Ho,Wo,P)
                acc = acc + jnp.dot(win.reshape(M2, P).astype(jnp.bfloat16),
                                    w2_ref[kh * 3 + kw],
                                    preferred_element_type=jnp.float32)
        return acc

    if proj:
        def kernel(*refs):
            planes = refs[:nplanes]
            (xsc_ref, w2_ref, w3_ref, ws_ref,
             g2_ref, b2_ref, g3_ref, b3_ref, gs_ref, bs_ref, out_ref) = refs[nplanes:]
            y1 = _conv3x3(planes, w2_ref)
            t2 = jnp.maximum(_bn_train(y1, g2_ref[...], b2_ref[...]), 0.0)
            y2 = jnp.dot(t2.astype(jnp.bfloat16), w3_ref[...],
                         preferred_element_type=jnp.float32)
            y3 = _bn_train(y2, g3_ref[...], b3_ref[...])
            ysc = jnp.dot(xsc_ref[...].astype(jnp.bfloat16), ws_ref[...],
                          preferred_element_type=jnp.float32)
            sc = _bn_train(ysc, gs_ref[...], bs_ref[...])
            out_ref[...] = jnp.maximum(y3 + sc, 0.0)
        return kernel
    else:
        def kernel(*refs):
            planes = refs[:nplanes]
            (xsc_ref, w2_ref, w3_ref,
             g2_ref, b2_ref, g3_ref, b3_ref, out_ref) = refs[nplanes:]
            y1 = _conv3x3(planes, w2_ref)
            t2 = jnp.maximum(_bn_train(y1, g2_ref[...], b2_ref[...]), 0.0)
            y2 = jnp.dot(t2.astype(jnp.bfloat16), w3_ref[...],
                         preferred_element_type=jnp.float32)
            y3 = _bn_train(y2, g3_ref[...], b3_ref[...])
            out_ref[...] = jnp.maximum(y3 + xsc_ref[...], 0.0)   # identity shortcut
        return kernel


# ---------------------------------------------------------------------------
# public wrapper (PyTorch-style NCHW in / NCHW out)
# ---------------------------------------------------------------------------
def asa_bottleneck_forward(x_nchw, params, stride):
    N, Cin, H, W = x_nchw.shape
    P = params["w1"].shape[1]
    P4 = params["w3"].shape[1]
    s = int(stride)
    proj = not (s == 1 and Cin == P4)

    Ho = (H + 2 - 3) // s + 1
    Wo = (W + 2 - 3) // s + 1
    M1 = N * H * W
    M2 = N * Ho * Wo

    x = jnp.transpose(x_nchw, (0, 2, 3, 1)).astype(jnp.float32)     # NCHW -> NHWC
    x2d = x.reshape(M1, Cin)

    v = lambda a: a.reshape(1, -1).astype(jnp.float32)
    bf = lambda a: a.astype(jnp.bfloat16)

    # ---- call 1: conv1x1 + BN1 + ReLU -------------------------------------
    ins1 = [x2d, bf(params["w1"]), v(params["g1"]), v(params["b1"])]
    z2d = pl.pallas_call(
        _k1_conv_bn_relu,
        out_shape=jax.ShapeDtypeStruct((M1, P), jnp.float32),
        grid_spec=pltpu.PrefetchScalarGridSpec(
            num_scalar_prefetch=0,
            grid=(1,),
            in_specs=_full_specs(ins1),
            out_specs=pl.BlockSpec((M1, P), _zero_index_map(2)),
        ),
        compiler_params=_COMPILER_PARAMS,
    )(*ins1)

    # ---- layout plumbing: zero-pad + stride-parity planes (plain XLA) ------
    z = z2d.reshape(N, H, W, P)
    zp = jnp.pad(z, ((0, 0), (1, 1), (1, 1), (0, 0)))
    Hq, Wq = Ho + 2, Wo + 2
    planes = []
    for a in range(s):
        for b in range(s):
            pab = zp[:, a::s, b::s, :]
            planes.append(jnp.pad(
                pab,
                ((0, 0), (0, Hq - pab.shape[1]), (0, Wq - pab.shape[2]), (0, 0))))

    # shortcut input: x itself (s == 1) or its s-strided subsample (s == 2).
    xsc = x[:, ::s, ::s, :].reshape(M2, Cin)

    w2 = bf(params["w2"].reshape(9, P, P))     # HWIO flattened: row t = kh*3 + kw
    w3 = bf(params["w3"])
    if proj:
        ins2 = planes + [xsc, w2, w3, bf(params["ws"]),
                         v(params["g2"]), v(params["b2"]),
                         v(params["g3"]), v(params["b3"]),
                         v(params["gs"]), v(params["bs"])]
    else:
        ins2 = planes + [xsc, w2, w3,
                         v(params["g2"]), v(params["b2"]),
                         v(params["g3"]), v(params["b3"])]

    out2d = pl.pallas_call(
        _make_k2(N, Ho, Wo, P, P4, s, proj),
        out_shape=jax.ShapeDtypeStruct((M2, P4), jnp.float32),
        grid_spec=pltpu.PrefetchScalarGridSpec(
            num_scalar_prefetch=0,
            grid=(1,),
            in_specs=_full_specs(ins2),
            out_specs=pl.BlockSpec((M2, P4), _zero_index_map(2)),
        ),
        compiler_params=_COMPILER_PARAMS,
    )(*ins2)

    out = out2d.reshape(N, Ho, Wo, P4)
    return jnp.transpose(out, (0, 3, 1, 2))                         # NHWC -> NCHW


# ---------------------------------------------------------------------------
# deterministic parameter init (shapes from the module's __init__, expansion=4)
# ---------------------------------------------------------------------------
def init_params(key, in_planes, planes, stride, expansion=4):
    P, P4 = planes, expansion * planes
    ks = jax.random.split(key, 12)
    n = lambda k, shape: jax.random.normal(k, shape, jnp.float32)
    p = {
        "w1": 0.1 * n(ks[0], (in_planes, P)),
        "w2": 0.1 * n(ks[1], (3, 3, P, P)),
        "w3": 0.1 * n(ks[2], (P, P4)),
        "g1": 1.0 + 0.1 * n(ks[3], (P,)),  "b1": 0.1 * n(ks[4], (P,)),
        "g2": 1.0 + 0.1 * n(ks[5], (P,)),  "b2": 0.1 * n(ks[6], (P,)),
        "g3": 1.0 + 0.1 * n(ks[7], (P4,)), "b3": 0.1 * n(ks[8], (P4,)),
    }
    if stride != 1 or in_planes != P4:
        p["ws"] = 0.1 * n(ks[9], (in_planes, P4))
        p["gs"] = 1.0 + 0.1 * n(ks[10], (P4,))
        p["bs"] = 0.1 * n(ks[11], (P4,))
    return p


# ---------------------------------------------------------------------------
# pure-JAX reference (validation only)
# ---------------------------------------------------------------------------
def reference_forward(x_nchw, params, stride):
    x = jnp.transpose(x_nchw, (0, 2, 3, 1)).astype(jnp.float32)

    def conv(a, w, s_, pad):
        return lax.conv_general_dilated(
            a, w, (s_, s_), ((pad, pad), (pad, pad)),
            dimension_numbers=("NHWC", "HWIO", "NHWC"),
            precision=lax.Precision.HIGHEST)

    def bn(y, g, b):
        mean = jnp.mean(y, axis=(0, 1, 2), keepdims=True)
        var = jnp.mean(jnp.square(y - mean), axis=(0, 1, 2), keepdims=True)
        return (y - mean) * lax.rsqrt(var + _EPS) * g.reshape(1, 1, 1, -1) \
            + b.reshape(1, 1, 1, -1)

    Cin, P = params["w1"].shape
    P4 = params["w3"].shape[1]
    y0 = conv(x, params["w1"].reshape(1, 1, Cin, P), 1, 0)
    t1 = jnp.maximum(bn(y0, params["g1"], params["b1"]), 0.0)
    y1 = conv(t1, params["w2"], stride, 1)
    t2 = jnp.maximum(bn(y1, params["g2"], params["b2"]), 0.0)
    y3 = bn(conv(t2, params["w3"].reshape(1, 1, P, P4), 1, 0),
            params["g3"], params["b3"])
    if stride == 1 and Cin == P4:
        sc = x
    else:
        sc = bn(conv(x, params["ws"].reshape(1, 1, Cin, P4), stride, 0),
                params["gs"], params["bs"])
    out = jnp.maximum(y3 + sc, 0.0)
    return jnp.transpose(out, (0, 3, 1, 2))


def _max_norm_err(a, b):
    return float(jnp.max(jnp.abs(a - b) / (1.0 + jnp.abs(b))))


if __name__ == "__main__":
    key = jax.random.PRNGKey(0)
    kx1, kp1, kx2, kx3 = jax.random.split(key, 4)

    # Config A: downsampling bottleneck (stride=2, projection shortcut).
    N, Cin, H, W, planes, stride = 2, 16, 16, 16, 8, 2
    x = jax.random.normal(kx1, (N, Cin, H, W), jnp.float32)
    params = init_params(kp1, Cin, planes, stride)
    out = asa_bottleneck_forward(x, params, stride)
    jax.block_until_ready(out)
    ref = reference_forward(x, params, stride)
    assert out.shape == (N, 4 * planes, H // 2, W // 2), out.shape
    err = _max_norm_err(out, ref)
    assert err < 5e-2, f"projection(stride=2) mismatch: {err}"

    # Config B: identity shortcut (stride=1, in_planes == 4*planes).
    Cb = 32
    xb = jax.random.normal(kx2, (N, Cb, H, W), jnp.float32)
    params_b = init_params(jax.random.PRNGKey(1), Cb, 8, 1)
    out_b = asa_bottleneck_forward(xb, params_b, 1)
    jax.block_until_ready(out_b)
    ref_b = reference_forward(xb, params_b, 1)
    assert out_b.shape == (N, 32, H, W), out_b.shape
    err_b = _max_norm_err(out_b, ref_b)
    assert err_b < 5e-2, f"identity mismatch: {err_b}"

    # Config C: projection shortcut with stride=1 (channel expansion only).
    Cc = 16
    xc = jax.random.normal(kx3, (N, Cc, H, W), jnp.float32)
    params_c = init_params(jax.random.PRNGKey(2), Cc, 8, 1)
    out_c = asa_bottleneck_forward(xc, params_c, 1)
    jax.block_until_ready(out_c)
    ref_c = reference_forward(xc, params_c, 1)
    assert out_c.shape == (N, 32, H, W), out_c.shape
    err_c = _max_norm_err(out_c, ref_c)
    assert err_c < 5e-2, f"projection(stride=1) mismatch: {err_c}"

    print("KERNEL_OK")
</pallas_src>

<mosaic_0001>
module attributes {stable_mosaic.version = 11 : i64} {
  func.func @_k1_conv_bn_relu(%arg0: i32, %arg1: memref<512x16xf32, #tpu.memory_space<vmem>>, %arg2: memref<16x8xbf16, #tpu.memory_space<vmem>>, %arg3: memref<1x8xf32, #tpu.memory_space<vmem>>, %arg4: memref<1x8xf32, #tpu.memory_space<vmem>>, %arg5: memref<512x8xf32, #tpu.memory_space<vmem>>) attributes {dimension_semantics = [#tpu.dimension_semantics<arbitrary>], iteration_bounds = array<i64: 1>, scalar_prefetch = 0 : i64, scratch_operands = 0 : i64, tpu.core_type = #tpu.core_type<tc>, window_params = [{pipeline_mode = #tpu.pipeline_mode<synchronous>, transform_indices = @transform_0, window_bounds = array<i64: 512, 16>}, {pipeline_mode = #tpu.pipeline_mode<synchronous>, transform_indices = @transform_1, window_bounds = array<i64: 16, 8>}, {pipeline_mode = #tpu.pipeline_mode<synchronous>, transform_indices = @transform_2, window_bounds = array<i64: 1, 8>}, {pipeline_mode = #tpu.pipeline_mode<synchronous>, transform_indices = @transform_3, window_bounds = array<i64: 1, 8>}, {pipeline_mode = #tpu.pipeline_mode<synchronous>, transform_indices = @transform_4, window_bounds = array<i64: 512, 8>}]} {
    %c0 = arith.constant 0 : index
    %c0_0 = arith.constant 0 : index
    %0 = vector.load %arg1[%c0, %c0_0] : memref<512x16xf32, #tpu.memory_space<vmem>>, vector<512x16xf32>
    %1 = arith.truncf %0 : vector<512x16xf32> to vector<512x16xbf16>
    %c0_1 = arith.constant 0 : index
    %c0_2 = arith.constant 0 : index
    %2 = vector.load %arg2[%c0_1, %c0_2] : memref<16x8xbf16, #tpu.memory_space<vmem>>, vector<16x8xbf16>
    %cst = arith.constant dense<0.000000e+00> : vector<512x8xf32>
    %3 = tpu.matmul %1, %2, %cst {dimension_numbers = #tpu.dot_dimension_numbers<[1], [0], [0], [1], [0, 0, 1, 1], [], []>} : vector<512x16xbf16>, vector<16x8xbf16>, vector<512x8xf32> -> vector<512x8xf32>
    %c0_3 = arith.constant 0 : index
    %c0_4 = arith.constant 0 : index
    %4 = vector.load %arg3[%c0_3, %c0_4] : memref<1x8xf32, #tpu.memory_space<vmem>>, vector<1x8xf32>
    %c0_5 = arith.constant 0 : index
    %c0_6 = arith.constant 0 : index
    %5 = vector.load %arg4[%c0_5, %c0_6] : memref<1x8xf32, #tpu.memory_space<vmem>>, vector<1x8xf32>
    %cst_7 = arith.constant dense<0.000000e+00> : vector<8xf32>
    %6 = vector.multi_reduction <add>, %3, %cst_7 [0] : vector<512x8xf32> to vector<8xf32>
    %7 = vector.shape_cast %6 : vector<8xf32> to vector<1x8xf32>
    %8 = arith.mulf %3, %3 : vector<512x8xf32>
    %cst_8 = arith.constant dense<0.000000e+00> : vector<8xf32>
    %9 = vector.multi_reduction <add>, %8, %cst_8 [0] : vector<512x8xf32> to vector<8xf32>
    %10 = vector.shape_cast %9 : vector<8xf32> to vector<1x8xf32>
    %cst_9 = arith.constant 0.001953125 : f32
    %11 = vector.broadcast %cst_9 : f32 to vector<1x8xf32>
    %12 = arith.mulf %7, %11 : vector<1x8xf32>
    %cst_10 = arith.constant 0.001953125 : f32
    %13 = vector.broadcast %cst_10 : f32 to vector<1x8xf32>
    %14 = arith.mulf %10, %13 : vector<1x8xf32>
    %15 = arith.mulf %12, %12 : vector<1x8xf32>
    %16 = arith.subf %14, %15 : vector<1x8xf32>
    %17 = vector.broadcast %12 : vector<1x8xf32> to vector<512x8xf32>
    %18 = arith.subf %3, %17 : vector<512x8xf32>
    %cst_11 = arith.constant 9.99999974E-6 : f32
    %19 = vector.broadcast %cst_11 : f32 to vector<1x8xf32>
    %20 = arith.addf %16, %19 : vector<1x8xf32>
    %21 = math.rsqrt %20 : vector<1x8xf32>
    %22 = vector.broadcast %21 : vector<1x8xf32> to vector<512x8xf32>
    %23 = arith.mulf %18, %22 : vector<512x8xf32>
    %24 = vector.broadcast %4 : vector<1x8xf32> to vector<512x8xf32>
    %25 = arith.mulf %23, %24 : vector<512x8xf32>
    %26 = vector.broadcast %5 : vector<1x8xf32> to vector<512x8xf32>
    %27 = arith.addf %25, %26 : vector<512x8xf32>
    %cst_12 = arith.constant 0.000000e+00 : f32
    %28 = vector.broadcast %cst_12 : f32 to vector<512x8xf32>
    %29 = arith.maximumf %27, %28 : vector<512x8xf32>
    %c0_13 = arith.constant 0 : index
    %c0_14 = arith.constant 0 : index
    %30 = vector.load %arg5[%c0_13, %c0_14] : memref<512x8xf32, #tpu.memory_space<vmem>>, vector<512x8xf32>
    tpu.vector_store %arg5[%c0_13, %c0_14], %29 {strides = array<i32>} : memref<512x8xf32, #tpu.memory_space<vmem>>, vector<512x8xf32>,
    return
  }
  func.func @transform_0(%arg0: i32) -> (i32, i32) {
    %c0_i32 = arith.constant 0 : i32
    %c0_i32_0 = arith.constant 0 : i32
    %c0_i32_1 = arith.constant 0 : i32
    return %c0_i32, %c0_i32_0 : i32, i32
  }
  func.func @transform_1(%arg0: i32) -> (i32, i32) {
    %c0_i32 = arith.constant 0 : i32
    %c0_i32_0 = arith.constant 0 : i32
    %c0_i32_1 = arith.constant 0 : i32
    return %c0_i32, %c0_i32_0 : i32, i32
  }
  func.func @transform_2(%arg0: i32) -> (i32, i32) {
    %c0_i32 = arith.constant 0 : i32
    %c0_i32_0 = arith.constant 0 : i32
    %c0_i32_1 = arith.constant 0 : i32
    return %c0_i32, %c0_i32_0 : i32, i32
  }
  func.func @transform_3(%arg0: i32) -> (i32, i32) {
    %c0_i32 = arith.constant 0 : i32
    %c0_i32_0 = arith.constant 0 : i32
    %c0_i32_1 = arith.constant 0 : i32
    return %c0_i32, %c0_i32_0 : i32, i32
  }
  func.func @transform_4(%arg0: i32) -> (i32, i32) {
    %c0_i32 = arith.constant 0 : i32
    %c0_i32_0 = arith.constant 0 : i32
    %c0_i32_1 = arith.constant 0 : i32
    return %c0_i32, %c0_i32_0 : i32, i32
  }
}

</mosaic_0001>

<llo_original>
// kernel: tpu_custom_call.1
$region0: #{tpu_custom_call.1}
  #allocation0 [shape = 'u32[]', space=smem, size = 0x4, offset = 0x4, fixed_abs, tag = 'smem constant byte address 0x4 - core index']
  #allocation1 [shape = 'u32[144,128]{1,0:T(1,128)}', space=vmem, size = 0x12000, scoped, tag = 'internal scratch']
  %s0 = inlined_call_operand.vmem [shape: f32[512,16], index: 0, kind: input, shape index: {}]
  %s1 = inlined_call_operand.vmem [shape: bf16[16,8], index: 1, kind: input, shape index: {}]
  %s2 = inlined_call_operand.vmem [shape: f32[1,8], index: 2, kind: input, shape index: {}]
  %s3 = inlined_call_operand.vmem [shape: f32[1,8], index: 3, kind: input, shape index: {}]
  %s4 = inlined_call_operand.vmem [shape: f32[512,8], index: 4, kind: output, shape index: {}]
  %s5 = sld [smem:[#allocation0]]
  $region26: #{tpu_custom_call.1} parent=0
    _
  %s7 = ssub.s32 1, %s5
  %s8 = scalar_select 0, %s7, %s5
  // Predicated region
  $region2: #{tpu_custom_call.1} parent=0 // pred_check
    _
  $region3: #{tpu_custom_call.1} parent=0 // pred_check_branch
    %10 = sbr.rel (0) target = $region5
  $region4: #{tpu_custom_call.1} parent=0 // pred_region
    _
  $region5: #{tpu_custom_call.1} parent=0 // pred_fallthru
    _
  // Predicated region
  $region6: #{tpu_custom_call.1} parent=0 // pred_check
    _
  $region7: #{tpu_custom_call.1} parent=0 // pred_check_branch
    %12 = sbr.rel (0) target = $region9
  $region8: #{tpu_custom_call.1} parent=0 // pred_region
    _
  $region9: #{tpu_custom_call.1} parent=0 // pred_fallthru
    _
  // Predicated region
  $region10: #{tpu_custom_call.1} parent=0 // pred_check
    _
  $region11: #{tpu_custom_call.1} parent=0 // pred_check_branch
    %14 = sbr.rel (0) target = $region13
  $region12: #{tpu_custom_call.1} parent=0 // pred_region
    _
  $region13: #{tpu_custom_call.1} parent=0 // pred_fallthru
    _
  // Predicated region
  $region14: #{tpu_custom_call.1} parent=0 // pred_check
    _
  $region15: #{tpu_custom_call.1} parent=0 // pred_check_branch
    %16 = sbr.rel (0) target = $region17
  $region16: #{tpu_custom_call.1} parent=0 // pred_region
    _
  $region17: #{tpu_custom_call.1} parent=0 // pred_fallthru
    _
  %v18 = vld [vmem:[%s0] sm:$0xff]
  %v19 = vld [vmem:[%s0 + $0x8] sm:$0xff]
  %v20 = vld [vmem:[%s0 + $0x10] sm:$0xff]
  %v21 = vld [vmem:[%s0 + $0x18] sm:$0xff]
  %v22 = vld [vmem:[%s0 + $0x20] sm:$0xff]
  %v23 = vld [vmem:[%s0 + $0x28] sm:$0xff]
  %v24 = vld [vmem:[%s0 + $0x30] sm:$0xff]
  %v25 = vld [vmem:[%s0 + $0x38] sm:$0xff]
  %v26 = vld [vmem:[%s0 + $0x40] sm:$0xff]
  %v27 = vld [vmem:[%s0 + $0x48] sm:$0xff]
  %v28 = vld [vmem:[%s0 + $0x50] sm:$0xff]
  %v29 = vld [vmem:[%s0 + $0x58] sm:$0xff]
  %v30 = vld [vmem:[%s0 + $0x60] sm:$0xff]
  %v31 = vld [vmem:[%s0 + $0x68] sm:$0xff]
  %v32 = vld [vmem:[%s0 + $0x70] sm:$0xff]
  %v33 = vld [vmem:[%s0 + $0x78] sm:$0xff]
  %v34 = vld [vmem:[%s0 + $0x80] sm:$0xff]
  %v35 = vld [vmem:[%s0 + $0x88] sm:$0xff]
  %v36 = vld [vmem:[%s0 + $0x90] sm:$0xff]
  %v37 = vld [vmem:[%s0 + $0x98] sm:$0xff]
  %v38 = vld [vmem:[%s0 + $0xa0] sm:$0xff]
  %v39 = vld [vmem:[%s0 + $0xa8] sm:$0xff]
  %v40 = vld [vmem:[%s0 + $0xb0] sm:$0xff]
  %v41 = vld [vmem:[%s0 + $0xb8] sm:$0xff]
  %v42 = vld [vmem:[%s0 + $0xc0] sm:$0xff]
  %v43 = vld [vmem:[%s0 + $0xc8] sm:$0xff]
  %v44 = vld [vmem:[%s0 + $0xd0] sm:$0xff]
  %v45 = vld [vmem:[%s0 + $0xd8] sm:$0xff]
  %v46 = vld [vmem:[%s0 + $0xe0] sm:$0xff]
  %v47 = vld [vmem:[%s0 + $0xe8] sm:$0xff]
  %v48 = vld [vmem:[%s0 + $0xf0] sm:$0xff]
  %v49 = vld [vmem:[%s0 + $0xf8] sm:$0xff]
  %v50 = vld [vmem:[%s0 + $0x100] sm:$0xff]
  %v51 = vld [vmem:[%s0 + $0x108] sm:$0xff]
  %v52 = vld [vmem:[%s0 + $0x110] sm:$0xff]
  %v53 = vld [vmem:[%s0 + $0x118] sm:$0xff]
  %v54 = vld [vmem:[%s0 + $0x120] sm:$0xff]
  %v55 = vld [vmem:[%s0 + $0x128] sm:$0xff]
  %v56 = vld [vmem:[%s0 + $0x130] sm:$0xff]
  %v57 = vld [vmem:[%s0 + $0x138] sm:$0xff]
  %v58 = vld [vmem:[%s0 + $0x140] sm:$0xff]
  %v59 = vld [vmem:[%s0 + $0x148] sm:$0xff]
  %v60 = vld [vmem:[%s0 + $0x150] sm:$0xff]
  %v61 = vld [vmem:[%s0 + $0x158] sm:$0xff]
  %v62 = vld [vmem:[%s0 + $0x160] sm:$0xff]
  %v63 = vld [vmem:[%s0 + $0x168] sm:$0xff]
  %v64 = vld [vmem:[%s0 + $0x170] sm:$0xff]
  %v65 = vld [vmem:[%s0 + $0x178] sm:$0xff]
  %v66 = vld [vmem:[%s0 + $0x180] sm:$0xff]
  %v67 = vld [vmem:[%s0 + $0x188] sm:$0xff]
  %v68 = vld [vmem:[%s0 + $0x190] sm:$0xff]
  %v69 = vld [vmem:[%s0 + $0x198] sm:$0xff]
  %v70 = vld [vmem:[%s0 + $0x1a0] sm:$0xff]
  %v71 = vld [vmem:[%s0 + $0x1a8] sm:$0xff]
  %v72 = vld [vmem:[%s0 + $0x1b0] sm:$0xff]
  %v73 = vld [vmem:[%s0 + $0x1b8] sm:$0xff]
  %v74 = vld [vmem:[%s0 + $0x1c0] sm:$0xff]
  %v75 = vld [vmem:[%s0 + $0x1c8] sm:$0xff]
  %v76 = vld [vmem:[%s0 + $0x1d0] sm:$0xff]
  %v77 = vld [vmem:[%s0 + $0x1d8] sm:$0xff]
  %v78 = vld [vmem:[%s0 + $0x1e0] sm:$0xff]
  %v79 = vld [vmem:[%s0 + $0x1e8] sm:$0xff]
  %v80 = vld [vmem:[%s0 + $0x1f0] sm:$0xff]
  %v81 = vld [vmem:[%s0 + $0x1f8] sm:$0xff]
  %v82 = vpack.c.bf16 %v19, %v18
  %v83 = vpack.c.bf16 %v21, %v20
  %v84 = vpack.c.bf16 %v23, %v22
  %v85 = vpack.c.bf16 %v25, %v24
  %v86 = vpack.c.bf16 %v27, %v26
  %v87 = vpack.c.bf16 %v29, %v28
  %v88 = vpack.c.bf16 %v31, %v30
  %v89 = vpack.c.bf16 %v33, %v32
  %v90 = vpack.c.bf16 %v35, %v34
  %v91 = vpack.c.bf16 %v37, %v36
  %v92 = vpack.c.bf16 %v39, %v38
  %v93 = vpack.c.bf16 %v41, %v40
  %v94 = vpack.c.bf16 %v43, %v42
  %v95 = vpack.c.bf16 %v45, %v44
  %v96 = vpack.c.bf16 %v47, %v46
  %v97 = vpack.c.bf16 %v49, %v48
  %v98 = vpack.c.bf16 %v51, %v50
  %v99 = vpack.c.bf16 %v53, %v52
  %v100 = vpack.c.bf16 %v55, %v54
  %v101 = vpack.c.bf16 %v57, %v56
  %v102 = vpack.c.bf16 %v59, %v58
  %v103 = vpack.c.bf16 %v61, %v60
  %v104 = vpack.c.bf16 %v63, %v62
  %v105 = vpack.c.bf16 %v65, %v64
  %v106 = vpack.c.bf16 %v67, %v66
  %v107 = vpack.c.bf16 %v69, %v68
  %v108 = vpack.c.bf16 %v71, %v70
  %v109 = vpack.c.bf16 %v73, %v72
  %v110 = vpack.c.bf16 %v75, %v74
  %v111 = vpack.c.bf16 %v77, %v76
  %v112 = vpack.c.bf16 %v79, %v78
  %v113 = vpack.c.bf16 %v81, %v80
  %v114 = vld [vmem:[%s1] sm:$0xf]
  %v115 = vld [vmem:[%s1 + $0x4] sm:$0xf]
  %v118 = vunpack.c.l.b16 %v114
  %v119 = vunpack.c.l.b16 %v115
  %v120 = vpack.c.b16 %v119, %v118
  %vm122 = vcmask 130048
  %v124 = vsel %vm122, %v82, 0
  %v127 = vsel %vm122, %v83, 0
  %v130 = vsel %vm122, %v84, 0
  %v133 = vsel %vm122, %v85, 0
  %v136 = vsel %vm122, %v86, 0
  %v139 = vsel %vm122, %v87, 0
  %v142 = vsel %vm122, %v88, 0
  %v145 = vsel %vm122, %v89, 0
  %v148 = vsel %vm122, %v90, 0
  %v151 = vsel %vm122, %v91, 0
  %v154 = vsel %vm122, %v92, 0
  %v157 = vsel %vm122, %v93, 0
  %v160 = vsel %vm122, %v94, 0
  %v163 = vsel %vm122, %v95, 0
  %v166 = vsel %vm122, %v96, 0
  %v169 = vsel %vm122, %v97, 0
  %v172 = vsel %vm122, %v98, 0
  %v175 = vsel %vm122, %v99, 0
  %v178 = vsel %vm122, %v100, 0
  %v181 = vsel %vm122, %v101, 0
  %v184 = vsel %vm122, %v102, 0
  %v187 = vsel %vm122, %v103, 0
  %v190 = vsel %vm122, %v104, 0
  %v193 = vsel %vm122, %v105, 0
  %v196 = vsel %vm122, %v106, 0
  %v199 = vsel %vm122, %v107, 0
  %v202 = vsel %vm122, %v108, 0
  %v205 = vsel %vm122, %v109, 0
  %v208 = vsel %vm122, %v110, 0
  %v211 = vsel %vm122, %v111, 0
  %v214 = vsel %vm122, %v112, 0
  %v217 = vsel %vm122, %v113, 0
  %219 = vmatprep.subr.bf16.mxu0 0
  %220 = vmatpush1.bf16.msra.mxu0 0
  %221 = vmatprep.subr.bf16.mxu0 0
  %222 = vmatpush1.bf16.msra.mxu0 0
  %223 = vmatprep.subr.bf16.mxu0 0
  %224 = vmatpush1.bf16.msra.mxu0 0
  %225 = vmatprep.subr.bf16.mxu0 0
  %226 = vmatpush1.bf16.msra.mxu0 0
  %227 = vmatprep.subr.bf16.mxu0 0
  %228 = vmatpush1.bf16.msra.mxu0 0
  %229 = vmatprep.subr.bf16.mxu0 0
  %230 = vmatpush1.bf16.msra.mxu0 0
  %231 = vmatprep.subr.bf16.mxu0 0
  %232 = vmatpush1.bf16.msra.mxu0 0
  %233 = vmatprep.subr.bf16.mxu0 0
  %234 = vmatpush1.bf16.msra.mxu0 %v120
  %235 = vmatprep.subr.bf16.mxu0 0
  %236 = vmatpush2.bf16.msra.mxu0 0
  %237 = vmatprep.subr.bf16.mxu0 0
  %238 = vmatpush2.bf16.msra.mxu0 0
  %239 = vmatprep.subr.bf16.mxu0 0
  %240 = vmatpush2.bf16.msra.mxu0 0
  %241 = vmatprep.subr.bf16.mxu0 0
  %242 = vmatpush2.bf16.msra.mxu0 0
  %243 = vmatprep.subr.bf16.mxu0 0
  %244 = vmatpush2.bf16.msra.mxu0 0
  %245 = vmatprep.subr.bf16.mxu0 0
  %246 = vmatpush2.bf16.msra.mxu0 0
  %247 = vmatprep.subr.bf16.mxu0 0
  %248 = vmatpush2.bf16.msra.mxu0 0
  %249 = vmatprep.subr.bf16.mxu0 0
  %250 = vmatpush2.bf16.msra.mxu0 0
  %251 = vmatprep.mubr.bf16.mxu0 0
  %252 = vmatmul.mubr.bf16.gmra.mxu0 %v124
  %v253 = vpop.f32.mrf.mxu0
  %v254 = vadd.f32 0.0, %v253
  %v255 = vpop.f32.mrf.mxu0
  %v256 = vpop.f32.mrf.mxu0
  %v257 = vadd.f32 0.0, %v256
  %v258 = vpop.f32.mrf.mxu0
  %259 = vmatprep.mubr.bf16.mxu0 0
  %260 = vmatmul.mubr.bf16.gmra.mxu0 %v127
  %v261 = vpop.f32.mrf.mxu0
  %v262 = vadd.f32 0.0, %v261
  %v263 = vpop.f32.mrf.mxu0
  %v264 = vpop.f32.mrf.mxu0
  %v265 = vadd.f32 0.0, %v264
  %v266 = vpop.f32.mrf.mxu0
  %267 = vmatprep.mubr.bf16.mxu0 0
  %268 = vmatmul.mubr.bf16.gmra.mxu0 %v130
  %v269 = vpop.f32.mrf.mxu0
  %v270 = vadd.f32 0.0, %v269
  %v271 = vpop.f32.mrf.mxu0
  %v272 = vpop.f32.mrf.mxu0
  %v273 = vadd.f32 0.0, %v272
  %v274 = vpop.f32.mrf.mxu0
  %275 = vmatprep.mubr.bf16.mxu0 0
  %276 = vmatmul.mubr.bf16.gmra.mxu0 %v133
  %v277 = vpop.f32.mrf.mxu0
  %v278 = vadd.f32 0.0, %v277
  %v279 = vpop.f32.mrf.mxu0
  %v280 = vpop.f32.mrf.mxu0
  %v281 = vadd.f32 0.0, %v280
  %v282 = vpop.f32.mrf.mxu0
  %283 = vmatprep.mubr.bf16.mxu0 0
  %284 = vmatmul.mubr.bf16.gmra.mxu0 %v136
  %v285 = vpop.f32.mrf.mxu0
  %v286 = vadd.f32 0.0, %v285
  %v287 = vpop.f32.mrf.mxu0
  %v288 = vpop.f32.mrf.mxu0
  %v289 = vadd.f32 0.0, %v288
  %v290 = vpop.f32.mrf.mxu0
  %291 = vmatprep.mubr.bf16.mxu0 0
  %292 = vmatmul.mubr.bf16.gmra.mxu0 %v139
  %v293 = vpop.f32.mrf.mxu0
  %v294 = vadd.f32 0.0, %v293
  %v295 = vpop.f32.mrf.mxu0
  %v296 = vpop.f32.mrf.mxu0
  %v297 = vadd.f32 0.0, %v296
  %v298 = vpop.f32.mrf.mxu0
  %299 = vmatprep.mubr.bf16.mxu0 0
  %300 = vmatmul.mubr.bf16.gmra.mxu0 %v142
  %v301 = vpop.f32.mrf.mxu0
  %v302 = vadd.f32 0.0, %v301
  %v303 = vpop.f32.mrf.mxu0
  %v304 = vpop.f32.mrf.mxu0
  %v305 = vadd.f32 0.0, %v304
  %v306 = vpop.f32.mrf.mxu0
  %307 = vmatprep.mubr.bf16.mxu0 0
  %308 = vmatmul.mubr.bf16.gmra.mxu0 %v145
  %v309 = vpop.f32.mrf.mxu0
  %v310 = vadd.f32 0.0, %v309
  %v311 = vpop.f32.mrf.mxu0
  %v312 = vpop.f32.mrf.mxu0
  %v313 = vadd.f32 0.0, %v312
  %v314 = vpop.f32.mrf.mxu0
  %315 = vmatprep.mubr.bf16.mxu0 0
  %316 = vmatmul.mubr.bf16.gmra.mxu0 %v148
  %v317 = vpop.f32.mrf.mxu0
  %v318 = vadd.f32 0.0, %v317
  %v319 = vpop.f32.mrf.mxu0
  %v320 = vpop.f32.mrf.mxu0
  %v321 = vadd.f32 0.0, %v320
  %v322 = vpop.f32.mrf.mxu0
  %323 = vmatprep.mubr.bf16.mxu0 0
  %324 = vmatmul.mubr.bf16.gmra.mxu0 %v151
  %v325 = vpop.f32.mrf.mxu0
  %v326 = vadd.f32 0.0, %v325
  %v327 = vpop.f32.mrf.mxu0
  %v328 = vpop.f32.mrf.mxu0
  %v329 = vadd.f32 0.0, %v328
  %v330 = vpop.f32.mrf.mxu0
  %331 = vmatprep.mubr.bf16.mxu0 0
  %332 = vmatmul.mubr.bf16.gmra.mxu0 %v154
  %v333 = vpop.f32.mrf.mxu0
  %v334 = vadd.f32 0.0, %v333
  %v335 = vpop.f32.mrf.mxu0
  %v336 = vpop.f32.mrf.mxu0
  %v337 = vadd.f32 0.0, %v336
  %v338 = vpop.f32.mrf.mxu0
  %339 = vmatprep.mubr.bf16.mxu0 0
  %340 = vmatmul.mubr.bf16.gmra.mxu0 %v157
  %v341 = vpop.f32.mrf.mxu0
  %v342 = vadd.f32 0.0, %v341
  %v343 = vpop.f32.mrf.mxu0
  %v344 = vpop.f32.mrf.mxu0
  %v345 = vadd.f32 0.0, %v344
  %v346 = vpop.f32.mrf.mxu0
  %347 = vmatprep.mubr.bf16.mxu0 0
  %348 = vmatmul.mubr.bf16.gmra.mxu0 %v160
  %v349 = vpop.f32.mrf.mxu0
  %v350 = vadd.f32 0.0, %v349
  %v351 = vpop.f32.mrf.mxu0
  %v352 = vpop.f32.mrf.mxu0
  %v353 = vadd.f32 0.0, %v352
  %v354 = vpop.f32.mrf.mxu0
  %355 = vmatprep.mubr.bf16.mxu0 0
  %356 = vmatmul.mubr.bf16.gmra.mxu0 %v163
  %v357 = vpop.f32.mrf.mxu0
  %v358 = vadd.f32 0.0, %v357
  %v359 = vpop.f32.mrf.mxu0
  %v360 = vpop.f32.mrf.mxu0
  %v361 = vadd.f32 0.0, %v360
  %v362 = vpop.f32.mrf.mxu0
  %363 = vmatprep.mubr.bf16.mxu0 0
  %364 = vmatmul.mubr.bf16.gmra.mxu0 %v166
  %v365 = vpop.f32.mrf.mxu0
  %v366 = vadd.f32 0.0, %v365
  %v367 = vpop.f32.mrf.mxu0
  %v368 = vpop.f32.mrf.mxu0
  %v369 = vadd.f32 0.0, %v368
  %v370 = vpop.f32.mrf.mxu0
  %371 = vmatprep.mubr.bf16.mxu0 0
  %372 = vmatmul.mubr.bf16.gmra.mxu0 %v169
  %v373 = vpop.f32.mrf.mxu0
  %v374 = vadd.f32 0.0, %v373
  %v375 = vpop.f32.mrf.mxu0
  %v376 = vpop.f32.mrf.mxu0
  %v377 = vadd.f32 0.0, %v376
  %v378 = vpop.f32.mrf.mxu0
  %379 = vmatprep.mubr.bf16.mxu0 0
  %380 = vmatmul.mubr.bf16.gmra.mxu0 %v172
  %v381 = vpop.f32.mrf.mxu0
  %v382 = vadd.f32 0.0, %v381
  %v383 = vpop.f32.mrf.mxu0
  %v384 = vpop.f32.mrf.mxu0
  %v385 = vadd.f32 0.0, %v384
  %v386 = vpop.f32.mrf.mxu0
  %387 = vmatprep.mubr.bf16.mxu0 0
  %388 = vmatmul.mubr.bf16.gmra.mxu0 %v175
  %v389 = vpop.f32.mrf.mxu0
  %v390 = vadd.f32 0.0, %v389
  %v391 = vpop.f32.mrf.mxu0
  %v392 = vpop.f32.mrf.mxu0
  %v393 = vadd.f32 0.0, %v392
  %v394 = vpop.f32.mrf.mxu0
  %395 = vmatprep.mubr.bf16.mxu0 0
  %396 = vmatmul.mubr.bf16.gmra.mxu0 %v178
  %v397 = vpop.f32.mrf.mxu0
  %v398 = vadd.f32 0.0, %v397
  %v399 = vpop.f32.mrf.mxu0
  %v400 = vpop.f32.mrf.mxu0
  %v401 = vadd.f32 0.0, %v400
  %v402 = vpop.f32.mrf.mxu0
  %403 = vmatprep.mubr.bf16.mxu0 0
  %404 = vmatmul.mubr.bf16.gmra.mxu0 %v181
  %v405 = vpop.f32.mrf.mxu0
  %v406 = vadd.f32 0.0, %v405
  %v407 = vpop.f32.mrf.mxu0
  %v408 = vpop.f32.mrf.mxu0
  %v409 = vadd.f32 0.0, %v408
  %v410 = vpop.f32.mrf.mxu0
  %411 = vmatprep.mubr.bf16.mxu0 0
  %412 = vmatmul.mubr.bf16.gmra.mxu0 %v184
  %v413 = vpop.f32.mrf.mxu0
  %v414 = vadd.f32 0.0, %v413
  %v415 = vpop.f32.mrf.mxu0
  %v416 = vpop.f32.mrf.mxu0
  %v417 = vadd.f32 0.0, %v416
  %v418 = vpop.f32.mrf.mxu0
  %419 = vmatprep.mubr.bf16.mxu0 0
  %420 = vmatmul.mubr.bf16.gmra.mxu0 %v187
  %v421 = vpop.f32.mrf.mxu0
  %v422 = vadd.f32 0.0, %v421
  %v423 = vpop.f32.mrf.mxu0
  %v424 = vpop.f32.mrf.mxu0
  %v425 = vadd.f32 0.0, %v424
  %v426 = vpop.f32.mrf.mxu0
  %427 = vmatprep.mubr.bf16.mxu0 0
  %428 = vmatmul.mubr.bf16.gmra.mxu0 %v190
  %v429 = vpop.f32.mrf.mxu0
  %v430 = vadd.f32 0.0, %v429
  %v431 = vpop.f32.mrf.mxu0
  %v432 = vpop.f32.mrf.mxu0
  %v433 = vadd.f32 0.0, %v432
  %v434 = vpop.f32.mrf.mxu0
  %435 = vmatprep.mubr.bf16.mxu0 0
  %436 = vmatmul.mubr.bf16.gmra.mxu0 %v193
  %v437 = vpop.f32.mrf.mxu0
  %v438 = vadd.f32 0.0, %v437
  %v439 = vpop.f32.mrf.mxu0
  %v440 = vpop.f32.mrf.mxu0
  %v441 = vadd.f32 0.0, %v440
  %v442 = vpop.f32.mrf.mxu0
  %443 = vmatprep.mubr.bf16.mxu0 0
  %444 = vmatmul.mubr.bf16.gmra.mxu0 %v196
  %v445 = vpop.f32.mrf.mxu0
  %v446 = vadd.f32 0.0, %v445
  %v447 = vpop.f32.mrf.mxu0
  %v448 = vpop.f32.mrf.mxu0
  %v449 = vadd.f32 0.0, %v448
  %v450 = vpop.f32.mrf.mxu0
  %451 = vmatprep.mubr.bf16.mxu0 0
  %452 = vmatmul.mubr.bf16.gmra.mxu0 %v199
  %v453 = vpop.f32.mrf.mxu0
  %v454 = vadd.f32 0.0, %v453
  %v455 = vpop.f32.mrf.mxu0
  %v456 = vpop.f32.mrf.mxu0
  %v457 = vadd.f32 0.0, %v456
  %v458 = vpop.f32.mrf.mxu0
  %459 = vmatprep.mubr.bf16.mxu0 0
  %460 = vmatmul.mubr.bf16.gmra.mxu0 %v202
  %v461 = vpop.f32.mrf.mxu0
  %v462 = vadd.f32 0.0, %v461
  %v463 = vpop.f32.mrf.mxu0
  %v464 = vpop.f32.mrf.mxu0
  %v465 = vadd.f32 0.0, %v464
  %v466 = vpop.f32.mrf.mxu0
  %467 = vmatprep.mubr.bf16.mxu0 0
  %468 = vmatmul.mubr.bf16.gmra.mxu0 %v205
  %v469 = vpop.f32.mrf.mxu0
  %v470 = vadd.f32 0.0, %v469
  %v471 = vpop.f32.mrf.mxu0
  %v472 = vpop.f32.mrf.mxu0
  %v473 = vadd.f32 0.0, %v472
  %v474 = vpop.f32.mrf.mxu0
  %475 = vmatprep.mubr.bf16.mxu0 0
  %476 = vmatmul.mubr.bf16.gmra.mxu0 %v208
  %v477 = vpop.f32.mrf.mxu0
  %v478 = vadd.f32 0.0, %v477
  %v479 = vpop.f32.mrf.mxu0
  %v480 = vpop.f32.mrf.mxu0
  %v481 = vadd.f32 0.0, %v480
  %v482 = vpop.f32.mrf.mxu0
  %483 = vmatprep.mubr.bf16.mxu0 0
  %484 = vmatmul.mubr.bf16.gmra.mxu0 %v211
  %v485 = vpop.f32.mrf.mxu0
  %v486 = vadd.f32 0.0, %v485
  %v487 = vpop.f32.mrf.mxu0
  %v488 = vpop.f32.mrf.mxu0
  %v489 = vadd.f32 0.0, %v488
  %v490 = vpop.f32.mrf.mxu0
  %491 = vmatprep.mubr.bf16.mxu0 0
  %492 = vmatmul.mubr.bf16.gmra.mxu0 %v214
  %v493 = vpop.f32.mrf.mxu0
  %v494 = vadd.f32 0.0, %v493
  %v495 = vpop.f32.mrf.mxu0
  %v496 = vpop.f32.mrf.mxu0
  %v497 = vadd.f32 0.0, %v496
  %v498 = vpop.f32.mrf.mxu0
  %499 = vmatprep.mubr.bf16.mxu0 0
  %500 = vmatmul.mubr.bf16.gmra.mxu0 %v217
  %v501 = vpop.f32.mrf.mxu0
  %v502 = vadd.f32 0.0, %v501
  %v503 = vpop.f32.mrf.mxu0
  %v504 = vpop.f32.mrf.mxu0
  %v505 = vadd.f32 0.0, %v504
  %v506 = vpop.f32.mrf.mxu0
  %507 = vdwg.mxu0
  %v508 = vld [vmem:[%s2] sm:$0x1]
  %v509 = vld [vmem:[%s3] sm:$0x1]
  %vm510 = vcmask 64512
  %v511 = vsel %vm510, %v254, 0.0
  %v512 = vsel %vm510, %v257, 0.0
  %v513 = vadd.f32 %v511, %v512
  %v514 = vsel %vm510, %v262, 0.0
  %v515 = vadd.f32 %v513, %v514
  %v516 = vsel %vm510, %v265, 0.0
  %v517 = vadd.f32 %v515, %v516
  %v518 = vsel %vm510, %v270, 0.0
  %v519 = vadd.f32 %v517, %v518
  %v520 = vsel %vm510, %v273, 0.0
  %v521 = vadd.f32 %v519, %v520
  %v522 = vsel %vm510, %v278, 0.0
  %v523 = vadd.f32 %v521, %v522
  %v524 = vsel %vm510, %v281, 0.0
  %v525 = vadd.f32 %v523, %v524
  %v526 = vsel %vm510, %v286, 0.0
  %v527 = vadd.f32 %v525, %v526
  %v528 = vsel %vm510, %v289, 0.0
  %v529 = vadd.f32 %v527, %v528
  %v530 = vsel %vm510, %v294, 0.0
  %v531 = vadd.f32 %v529, %v530
  %v532 = vsel %vm510, %v297, 0.0
  %v533 = vadd.f32 %v531, %v532
  %v534 = vsel %vm510, %v302, 0.0
  %v535 = vadd.f32 %v533, %v534
  %v536 = vsel %vm510, %v305, 0.0
  %v537 = vadd.f32 %v535, %v536
  %v538 = vsel %vm510, %v310, 0.0
  %v539 = vadd.f32 %v537, %v538
  %v540 = vsel %vm510, %v313, 0.0
  %v541 = vadd.f32 %v539, %v540
  %v542 = vsel %vm510, %v318, 0.0
  %v543 = vadd.f32 %v541, %v542
  %v544 = vsel %vm510, %v321, 0.0
  %v545 = vadd.f32 %v543, %v544
  %v546 = vsel %vm510, %v326, 0.0
  %v547 = vadd.f32 %v545, %v546
  %v548 = vsel %vm510, %v329, 0.0
  %v549 = vadd.f32 %v547, %v548
  %v550 = vsel %vm510, %v334, 0.0
  %v551 = vadd.f32 %v549, %v550
  %v552 = vsel %vm510, %v337, 0.0
  %v553 = vadd.f32 %v551, %v552
  %v554 = vsel %vm510, %v342, 0.0
  %v555 = vadd.f32 %v553, %v554
  %v556 = vsel %vm510, %v345, 0.0
  %v557 = vadd.f32 %v555, %v556
  %v558 = vsel %vm510, %v350, 0.0
  %v559 = vadd.f32 %v557, %v558
  %v560 = vsel %vm510, %v353, 0.0
  %v561 = vadd.f32 %v559, %v560
  %v562 = vsel %vm510, %v358, 0.0
  %v563 = vadd.f32 %v561, %v562
  %v564 = vsel %vm510, %v361, 0.0
  %v565 = vadd.f32 %v563, %v564
  %v566 = vsel %vm510, %v366, 0.0
  %v567 = vadd.f32 %v565, %v566
  %v568 = vsel %vm510, %v369, 0.0
  %v569 = vadd.f32 %v567, %v568
  %v570 = vsel %vm510, %v374, 0.0
  %v571 = vadd.f32 %v569, %v570
  %v572 = vsel %vm510, %v377, 0.0
  %v573 = vadd.f32 %v571, %v572
  %v574 = vsel %vm510, %v382, 0.0
  %v575 = vadd.f32 %v573, %v574
  %v576 = vsel %vm510, %v385, 0.0
  %v577 = vadd.f32 %v575, %v576
  %v578 = vsel %vm510, %v390, 0.0
  %v579 = vadd.f32 %v577, %v578
  %v580 = vsel %vm510, %v393, 0.0
  %v581 = vadd.f32 %v579, %v580
  %v582 = vsel %vm510, %v398, 0.0
  %v583 = vadd.f32 %v581, %v582
  %v584 = vsel %vm510, %v401, 0.0
  %v585 = vadd.f32 %v583, %v584
  %v586 = vsel %vm510, %v406, 0.0
  %v587 = vadd.f32 %v585, %v586
  %v588 = vsel %vm510, %v409, 0.0
  %v589 = vadd.f32 %v587, %v588
  %v590 = vsel %vm510, %v414, 0.0
  %v591 = vadd.f32 %v589, %v590
  %v592 = vsel %vm510, %v417, 0.0
  %v593 = vadd.f32 %v591, %v592
  %v594 = vsel %vm510, %v422, 0.0
  %v595 = vadd.f32 %v593, %v594
  %v596 = vsel %vm510, %v425, 0.0
  %v597 = vadd.f32 %v595, %v596
  %v598 = vsel %vm510, %v430, 0.0
  %v599 = vadd.f32 %v597, %v598
  %v600 = vsel %vm510, %v433, 0.0
  %v601 = vadd.f32 %v599, %v600
  %v602 = vsel %vm510, %v438, 0.0
  %v603 = vadd.f32 %v601, %v602
  %v604 = vsel %vm510, %v441, 0.0
  %v605 = vadd.f32 %v603, %v604
  %v606 = vsel %vm510, %v446, 0.0
  %v607 = vadd.f32 %v605, %v606
  %v608 = vsel %vm510, %v449, 0.0
  %v609 = vadd.f32 %v607, %v608
  %v610 = vsel %vm510, %v454, 0.0
  %v611 = vadd.f32 %v609, %v610
  %v612 = vsel %vm510, %v457, 0.0
  %v613 = vadd.f32 %v611, %v612
  %v614 = vsel %vm510, %v462, 0.0
  %v615 = vadd.f32 %v613, %v614
  %v616 = vsel %vm510, %v465, 0.0
  %v617 = vadd.f32 %v615, %v616
  %v618 = vsel %vm510, %v470, 0.0
  %v619 = vadd.f32 %v617, %v618
  %v620 = vsel %vm510, %v473, 0.0
  %v621 = vadd.f32 %v619, %v620
  %v622 = vsel %vm510, %v478, 0.0
  %v623 = vadd.f32 %v621, %v622
  %v624 = vsel %vm510, %v481, 0.0
  %v625 = vadd.f32 %v623, %v624
  %v626 = vsel %vm510, %v486, 0.0
  %v627 = vadd.f32 %v625, %v626
  %v628 = vsel %vm510, %v489, 0.0
  %v629 = vadd.f32 %v627, %v628
  %v630 = vsel %vm510, %v494, 0.0
  %v631 = vadd.f32 %v629, %v630
  %v632 = vsel %vm510, %v497, 0.0
  %v633 = vadd.f32 %v631, %v632
  %v634 = vsel %vm510, %v502, 0.0
  %v635 = vadd.f32 %v633, %v634
  %v636 = vsel %vm510, %v505, 0.0
  %v637 = vadd.f32 %v635, %v636
  %v638 = vrot.slane %v637, 4
  %v639 = vadd.f32 %v637, %v638
  %v640 = vrot.slane %v639, 2
  %v641 = vadd.f32 %v639, %v640
  %v642 = vrot.slane %v641, 1
  %v643 = vadd.f32 %v641, %v642
  %v644 = vmul.f32 %v254, %v254
  %v645 = vmul.f32 %v257, %v257
  %v646 = vmul.f32 %v262, %v262
  %v647 = vmul.f32 %v265, %v265
  %v648 = vmul.f32 %v270, %v270
  %v649 = vmul.f32 %v273, %v273
  %v650 = vmul.f32 %v278, %v278
  %v651 = vmul.f32 %v281, %v281
  %v652 = vmul.f32 %v286, %v286
  %v653 = vmul.f32 %v289, %v289
  %v654 = vmul.f32 %v294, %v294
  %v655 = vmul.f32 %v297, %v297
  %v656 = vmul.f32 %v302, %v302
  %v657 = vmul.f32 %v305, %v305
  %v658 = vmul.f32 %v310, %v310
  %v659 = vmul.f32 %v313, %v313
  %v660 = vmul.f32 %v318, %v318
  %v661 = vmul.f32 %v321, %v321
  %v662 = vmul.f32 %v326, %v326
  %v663 = vmul.f32 %v329, %v329
  %v664 = vmul.f32 %v334, %v334
  %v665 = vmul.f32 %v337, %v337
  %v666 = vmul.f32 %v342, %v342
  %v667 = vmul.f32 %v345, %v345
  %v668 = vmul.f32 %v350, %v350
  %v669 = vmul.f32 %v353, %v353
  %v670 = vmul.f32 %v358, %v358
  %v671 = vmul.f32 %v361, %v361
  %v672 = vmul.f32 %v366, %v366
  %v673 = vmul.f32 %v369, %v369
  %v674 = vmul.f32 %v374, %v374
  %v675 = vmul.f32 %v377, %v377
  %v676 = vmul.f32 %v382, %v382
  %v677 = vmul.f32 %v385, %v385
  %v678 = vmul.f32 %v390, %v390
  %v679 = vmul.f32 %v393, %v393
  %v680 = vmul.f32 %v398, %v398
  %v681 = vmul.f32 %v401, %v401
  %v682 = vmul.f32 %v406, %v406
  %v683 = vmul.f32 %v409, %v409
  %v684 = vmul.f32 %v414, %v414
  %v685 = vmul.f32 %v417, %v417
  %v686 = vmul.f32 %v422, %v422
  %v687 = vmul.f32 %v425, %v425
  %v688 = vmul.f32 %v430, %v430
  %v689 = vmul.f32 %v433, %v433
  %v690 = vmul.f32 %v438, %v438
  %v691 = vmul.f32 %v441, %v441
  %v692 = vmul.f32 %v446, %v446
  %v693 = vmul.f32 %v449, %v449
  %v694 = vmul.f32 %v454, %v454
  %v695 = vmul.f32 %v457, %v457
  %v696 = vmul.f32 %v462, %v462
  %v697 = vmul.f32 %v465, %v465
  %v698 = vmul.f32 %v470, %v470
  %v699 = vmul.f32 %v473, %v473
  %v700 = vmul.f32 %v478, %v478
  %v701 = vmul.f32 %v481, %v481
  %v702 = vmul.f32 %v486, %v486
  %v703 = vmul.f32 %v489, %v489
  %v704 = vmul.f32 %v494, %v494
  %v705 = vmul.f32 %v497, %v497
  %v706 = vmul.f32 %v502, %v502
  %v707 = vmul.f32 %v505, %v505
  %v708 = vsel %vm510, %v644, 0.0
  %v709 = vsel %vm510, %v645, 0.0
  %v710 = vadd.f32 %v708, %v709
  %v711 = vsel %vm510, %v646, 0.0
  %v712 = vadd.f32 %v710, %v711
  %v713 = vsel %vm510, %v647, 0.0
  %v714 = vadd.f32 %v712, %v713
  %v715 = vsel %vm510, %v648, 0.0
  %v716 = vadd.f32 %v714, %v715
  %v717 = vsel %vm510, %v649, 0.0
  %v718 = vadd.f32 %v716, %v717
  %v719 = vsel %vm510, %v650, 0.0
  %v720 = vadd.f32 %v718, %v719
  %v721 = vsel %vm510, %v651, 0.0
  %v722 = vadd.f32 %v720, %v721
  %v723 = vsel %vm510, %v652, 0.0
  %v724 = vadd.f32 %v722, %v723
  %v725 = vsel %vm510, %v653, 0.0
  %v726 = vadd.f32 %v724, %v725
  %v727 = vsel %vm510, %v654, 0.0
  %v728 = vadd.f32 %v726, %v727
  %v729 = vsel %vm510, %v655, 0.0
  %v730 = vadd.f32 %v728, %v729
  %v731 = vsel %vm510, %v656, 0.0
  %v732 = vadd.f32 %v730, %v731
  %v733 = vsel %vm510, %v657, 0.0
  %v734 = vadd.f32 %v732, %v733
  %v735 = vsel %vm510, %v658, 0.0
  %v736 = vadd.f32 %v734, %v735
  %v737 = vsel %vm510, %v659, 0.0
  %v738 = vadd.f32 %v736, %v737
  %v739 = vsel %vm510, %v660, 0.0
  %v740 = vadd.f32 %v738, %v739
  %v741 = vsel %vm510, %v661, 0.0
  %v742 = vadd.f32 %v740, %v741
  %v743 = vsel %vm510, %v662, 0.0
  %v744 = vadd.f32 %v742, %v743
  %v745 = vsel %vm510, %v663, 0.0
  %v746 = vadd.f32 %v744, %v745
  %v747 = vsel %vm510, %v664, 0.0
  %v748 = vadd.f32 %v746, %v747
  %v749 = vsel %vm510, %v665, 0.0
  %v750 = vadd.f32 %v748, %v749
  %v751 = vsel %vm510, %v666, 0.0
  %v752 = vadd.f32 %v750, %v751
  %v753 = vsel %vm510, %v667, 0.0
  %v754 = vadd.f32 %v752, %v753
  %v755 = vsel %vm510, %v668, 0.0
  %v756 = vadd.f32 %v754, %v755
  %v757 = vsel %vm510, %v669, 0.0
  %v758 = vadd.f32 %v756, %v757
  %v759 = vsel %vm510, %v670, 0.0
  %v760 = vadd.f32 %v758, %v759
  %v761 = vsel %vm510, %v671, 0.0
  %v762 = vadd.f32 %v760, %v761
  %v763 = vsel %vm510, %v672, 0.0
  %v764 = vadd.f32 %v762, %v763
  %v765 = vsel %vm510, %v673, 0.0
  %v766 = vadd.f32 %v764, %v765
  %v767 = vsel %vm510, %v674, 0.0
  %v768 = vadd.f32 %v766, %v767
  %v769 = vsel %vm510, %v675, 0.0
  %v770 = vadd.f32 %v768, %v769
  %v771 = vsel %vm510, %v676, 0.0
  %v772 = vadd.f32 %v770, %v771
  %v773 = vsel %vm510, %v677, 0.0
  %v774 = vadd.f32 %v772, %v773
  %v775 = vsel %vm510, %v678, 0.0
  %v776 = vadd.f32 %v774, %v775
  %v777 = vsel %vm510, %v679, 0.0
  %v778 = vadd.f32 %v776, %v777
  %v779 = vsel %vm510, %v680, 0.0
  %v780 = vadd.f32 %v778, %v779
  %v781 = vsel %vm510, %v681, 0.0
  %v782 = vadd.f32 %v780, %v781
  %v783 = vsel %vm510, %v682, 0.0
  %v784 = vadd.f32 %v782, %v783
  %v785 = vsel %vm510, %v683, 0.0
  %v786 = vadd.f32 %v784, %v785
  %v787 = vsel %vm510, %v684, 0.0
  %v788 = vadd.f32 %v786, %v787
  %v789 = vsel %vm510, %v685, 0.0
  %v790 = vadd.f32 %v788, %v789
  %v791 = vsel %vm510, %v686, 0.0
  %v792 = vadd.f32 %v790, %v791
  %v793 = vsel %vm510, %v687, 0.0
  %v794 = vadd.f32 %v792, %v793
  %v795 = vsel %vm510, %v688, 0.0
  %v796 = vadd.f32 %v794, %v795
  %v797 = vsel %vm510, %v689, 0.0
  %v798 = vadd.f32 %v796, %v797
  %v799 = vsel %vm510, %v690, 0.0
  %v800 = vadd.f32 %v798, %v799
  %v801 = vsel %vm510, %v691, 0.0
  %v802 = vadd.f32 %v800, %v801
  %v803 = vsel %vm510, %v692, 0.0
  %v804 = vadd.f32 %v802, %v803
  %v805 = vsel %vm510, %v693, 0.0
  %v806 = vadd.f32 %v804, %v805
  %v807 = vsel %vm510, %v694, 0.0
  %v808 = vadd.f32 %v806, %v807
  %v809 = vsel %vm510, %v695, 0.0
  %v810 = vadd.f32 %v808, %v809
  %v811 = vsel %vm510, %v696, 0.0
  %v812 = vadd.f32 %v810, %v811
  %v813 = vsel %vm510, %v697, 0.0
  %v814 = vadd.f32 %v812, %v813
  %v815 = vsel %vm510, %v698, 0.0
  %v816 = vadd.f32 %v814, %v815
  %v817 = vsel %vm510, %v699, 0.0
  %v818 = vadd.f32 %v816, %v817
  %v819 = vsel %vm510, %v700, 0.0
  %v820 = vadd.f32 %v818, %v819
  %v821 = vsel %vm510, %v701, 0.0
  %v822 = vadd.f32 %v820, %v821
  %v823 = vsel %vm510, %v702, 0.0
  %v824 = vadd.f32 %v822, %v823
  %v825 = vsel %vm510, %v703, 0.0
  %v826 = vadd.f32 %v824, %v825
  %v827 = vsel %vm510, %v704, 0.0
  %v828 = vadd.f32 %v826, %v827
  %v829 = vsel %vm510, %v705, 0.0
  %v830 = vadd.f32 %v828, %v829
  %v831 = vsel %vm510, %v706, 0.0
  %v832 = vadd.f32 %v830, %v831
  %v833 = vsel %vm510, %v707, 0.0
  %v834 = vadd.f32 %v832, %v833
  %v835 = vrot.slane %v834, 4
  %v836 = vadd.f32 %v834, %v835
  %v837 = vrot.slane %v836, 2
  %v838 = vadd.f32 %v836, %v837
  %v839 = vrot.slane %v838, 1
  %v840 = vadd.f32 %v838, %v839
  %v841 = vmul.f32 %v643, 0.001953125
  %v842 = vmul.f32 %v840, 0.001953125
  %v843 = vmul.f32 %v841, %v841
  %v844 = vsub.f32 %v842, %v843
  %v845 = vsub.f32 %v254, %v841
  %v846 = vsub.f32 %v257, %v841
  %v847 = vsub.f32 %v262, %v841
  %v848 = vsub.f32 %v265, %v841
  %v849 = vsub.f32 %v270, %v841
  %v850 = vsub.f32 %v273, %v841
  %v851 = vsub.f32 %v278, %v841
  %v852 = vsub.f32 %v281, %v841
  %v853 = vsub.f32 %v286, %v841
  %v854 = vsub.f32 %v289, %v841
  %v855 = vsub.f32 %v294, %v841
  %v856 = vsub.f32 %v297, %v841
  %v857 = vsub.f32 %v302, %v841
  %v858 = vsub.f32 %v305, %v841
  %v859 = vsub.f32 %v310, %v841
  %v860 = vsub.f32 %v313, %v841
  %v861 = vsub.f32 %v318, %v841
  %v862 = vsub.f32 %v321, %v841
  %v863 = vsub.f32 %v326, %v841
  %v864 = vsub.f32 %v329, %v841
  %v865 = vsub.f32 %v334, %v841
  %v866 = vsub.f32 %v337, %v841
  %v867 = vsub.f32 %v342, %v841
  %v868 = vsub.f32 %v345, %v841
  %v869 = vsub.f32 %v350, %v841
  %v870 = vsub.f32 %v353, %v841
  %v871 = vsub.f32 %v358, %v841
  %v872 = vsub.f32 %v361, %v841
  %v873 = vsub.f32 %v366, %v841
  %v874 = vsub.f32 %v369, %v841
  %v875 = vsub.f32 %v374, %v841
  %v876 = vsub.f32 %v377, %v841
  %v877 = vsub.f32 %v382, %v841
  %v878 = vsub.f32 %v385, %v841
  %v879 = vsub.f32 %v390, %v841
  %v880 = vsub.f32 %v393, %v841
  %v881 = vsub.f32 %v398, %v841
  %v882 = vsub.f32 %v401, %v841
  %v883 = vsub.f32 %v406, %v841
  %v884 = vsub.f32 %v409, %v841
  %v885 = vsub.f32 %v414, %v841
  %v886 = vsub.f32 %v417, %v841
  %v887 = vsub.f32 %v422, %v841
  %v888 = vsub.f32 %v425, %v841
  %v889 = vsub.f32 %v430, %v841
  %v890 = vsub.f32 %v433, %v841
  %v891 = vsub.f32 %v438, %v841
  %v892 = vsub.f32 %v441, %v841
  %v893 = vsub.f32 %v446, %v841
  %v894 = vsub.f32 %v449, %v841
  %v895 = vsub.f32 %v454, %v841
  %v896 = vsub.f32 %v457, %v841
  %v897 = vsub.f32 %v462, %v841
  %v898 = vsub.f32 %v465, %v841
  %v899 = vsub.f32 %v470, %v841
  %v900 = vsub.f32 %v473, %v841
  %v901 = vsub.f32 %v478, %v841
  %v902 = vsub.f32 %v481, %v841
  %v903 = vsub.f32 %v486, %v841
  %v904 = vsub.f32 %v489, %v841
  %v905 = vsub.f32 %v494, %v841
  %v906 = vsub.f32 %v497, %v841
  %v907 = vsub.f32 %v502, %v841
  %v908 = vsub.f32 %v505, %v841
  %v909 = vadd.f32 %v844, 1e-05
  %v910 = vrsqrt.pop %v909
  %v911 = vmul.f32 %v845, %v910
  %v912 = vmul.f32 %v846, %v910
  %v913 = vmul.f32 %v847, %v910
  %v914 = vmul.f32 %v848, %v910
  %v915 = vmul.f32 %v849, %v910
  %v916 = vmul.f32 %v850, %v910
  %v917 = vmul.f32 %v851, %v910
  %v918 = vmul.f32 %v852, %v910
  %v919 = vmul.f32 %v853, %v910
  %v920 = vmul.f32 %v854, %v910
  %v921 = vmul.f32 %v855, %v910
  %v922 = vmul.f32 %v856, %v910
  %v923 = vmul.f32 %v857, %v910
  %v924 = vmul.f32 %v858, %v910
  %v925 = vmul.f32 %v859, %v910
  %v926 = vmul.f32 %v860, %v910
  %v927 = vmul.f32 %v861, %v910
  %v928 = vmul.f32 %v862, %v910
  %v929 = vmul.f32 %v863, %v910
  %v930 = vmul.f32 %v864, %v910
  %v931 = vmul.f32 %v865, %v910
  %v932 = vmul.f32 %v866, %v910
  %v933 = vmul.f32 %v867, %v910
  %v934 = vmul.f32 %v868, %v910
  %v935 = vmul.f32 %v869, %v910
  %v936 = vmul.f32 %v870, %v910
  %v937 = vmul.f32 %v871, %v910
  %v938 = vmul.f32 %v872, %v910
  %v939 = vmul.f32 %v873, %v910
  %v940 = vmul.f32 %v874, %v910
  %v941 = vmul.f32 %v875, %v910
  %v942 = vmul.f32 %v876, %v910
  %v943 = vmul.f32 %v877, %v910
  %v944 = vmul.f32 %v878, %v910
  %v945 = vmul.f32 %v879, %v910
  %v946 = vmul.f32 %v880, %v910
  %v947 = vmul.f32 %v881, %v910
  %v948 = vmul.f32 %v882, %v910
  %v949 = vmul.f32 %v883, %v910
  %v950 = vmul.f32 %v884, %v910
  %v951 = vmul.f32 %v885, %v910
  %v952 = vmul.f32 %v886, %v910
  %v953 = vmul.f32 %v887, %v910
  %v954 = vmul.f32 %v888, %v910
  %v955 = vmul.f32 %v889, %v910
  %v956 = vmul.f32 %v890, %v910
  %v957 = vmul.f32 %v891, %v910
  %v958 = vmul.f32 %v892, %v910
  %v959 = vmul.f32 %v893, %v910
  %v960 = vmul.f32 %v894, %v910
  %v961 = vmul.f32 %v895, %v910
  %v962 = vmul.f32 %v896, %v910
  %v963 = vmul.f32 %v897, %v910
  %v964 = vmul.f32 %v898, %v910
  %v965 = vmul.f32 %v899, %v910
  %v966 = vmul.f32 %v900, %v910
  %v967 = vmul.f32 %v901, %v910
  %v968 = vmul.f32 %v902, %v910
  %v969 = vmul.f32 %v903, %v910
  %v970 = vmul.f32 %v904, %v910
  %v971 = vmul.f32 %v905, %v910
  %v972 = vmul.f32 %v906, %v910
  %v973 = vmul.f32 %v907, %v910
  %v974 = vmul.f32 %v908, %v910
  %v976 = vlaneseq
  %v977 = vshrl.u32 %v976, 7
  %v978 = vsub.s32 0, %v977
  %v979 = vrot.slane %v508, %v978
  %v981 = vmul.f32 %v911, %v979
  %v982 = vmul.f32 %v912, %v979
  %v983 = vmul.f32 %v913, %v979
  %v984 = vmul.f32 %v914, %v979
  %v985 = vmul.f32 %v915, %v979
  %v986 = vmul.f32 %v916, %v979
  %v987 = vmul.f32 %v917, %v979
  %v988 = vmul.f32 %v918, %v979
  %v989 = vmul.f32 %v919, %v979
  %v990 = vmul.f32 %v920, %v979
  %v991 = vmul.f32 %v921, %v979
  %v992 = vmul.f32 %v922, %v979
  %v993 = vmul.f32 %v923, %v979
  %v994 = vmul.f32 %v924, %v979
  %v995 = vmul.f32 %v925, %v979
  %v996 = vmul.f32 %v926, %v979
  %v997 = vmul.f32 %v927, %v979
  %v998 = vmul.f32 %v928, %v979
  %v999 = vmul.f32 %v929, %v979
  %v1000 = vmul.f32 %v930, %v979
  %v1001 = vmul.f32 %v931, %v979
  %v1002 = vmul.f32 %v932, %v979
  %v1003 = vmul.f32 %v933, %v979
  %v1004 = vmul.f32 %v934, %v979
  %v1005 = vmul.f32 %v935, %v979
  %v1006 = vmul.f32 %v936, %v979
  %v1007 = vmul.f32 %v937, %v979
  %v1008 = vmul.f32 %v938, %v979
  %v1009 = vmul.f32 %v939, %v979
  %v1010 = vmul.f32 %v940, %v979
  %v1011 = vmul.f32 %v941, %v979
  %v1012 = vmul.f32 %v942, %v979
  %v1013 = vmul.f32 %v943, %v979
  %v1014 = vmul.f32 %v944, %v979
  %v1015 = vmul.f32 %v945, %v979
  %v1016 = vmul.f32 %v946, %v979
  %v1017 = vmul.f32 %v947, %v979
  %v1018 = vmul.f32 %v948, %v979
  %v1019 = vmul.f32 %v949, %v979
  %v1020 = vmul.f32 %v950, %v979
  %v1021 = vmul.f32 %v951, %v979
  %v1022 = vmul.f32 %v952, %v979
  %v1023 = vmul.f32 %v953, %v979
  %v1024 = vmul.f32 %v954, %v979
  %v1025 = vmul.f32 %v955, %v979
  %v1026 = vmul.f32 %v956, %v979
  %v1027 = vmul.f32 %v957, %v979
  %v1028 = vmul.f32 %v958, %v979
  %v1029 = vmul.f32 %v959, %v979
  %v1030 = vmul.f32 %v960, %v979
  %v1031 = vmul.f32 %v961, %v979
  %v1032 = vmul.f32 %v962, %v979
  %v1033 = vmul.f32 %v963, %v979
  %v1034 = vmul.f32 %v964, %v979
  %v1035 = vmul.f32 %v965, %v979
  %v1036 = vmul.f32 %v966, %v979
  %v1037 = vmul.f32 %v967, %v979
  %v1038 = vmul.f32 %v968, %v979
  %v1039 = vmul.f32 %v969, %v979
  %v1040 = vmul.f32 %v970, %v979
  %v1041 = vmul.f32 %v971, %v979
  %v1042 = vmul.f32 %v972, %v979
  %v1043 = vmul.f32 %v973, %v979
  %v1044 = vmul.f32 %v974, %v979
  %v1046 = vlaneseq
  %v1047 = vshrl.u32 %v1046, 7
  %v1048 = vsub.s32 0, %v1047
  %v1049 = vrot.slane %v509, %v1048
  %v1051 = vadd.f32 %v981, %v1049
  %v1052 = vadd.f32 %v982, %v1049
  %v1053 = vadd.f32 %v983, %v1049
  %v1054 = vadd.f32 %v984, %v1049
  %v1055 = vadd.f32 %v985, %v1049
  %v1056 = vadd.f32 %v986, %v1049
  %v1057 = vadd.f32 %v987, %v1049
  %v1058 = vadd.f32 %v988, %v1049
  %v1059 = vadd.f32 %v989, %v1049
  %v1060 = vadd.f32 %v990, %v1049
  %v1061 = vadd.f32 %v991, %v1049
  %v1062 = vadd.f32 %v992, %v1049
  %v1063 = vadd.f32 %v993, %v1049
  %v1064 = vadd.f32 %v994, %v1049
  %v1065 = vadd.f32 %v995, %v1049
  %v1066 = vadd.f32 %v996, %v1049
  %v1067 = vadd.f32 %v997, %v1049
  %v1068 = vadd.f32 %v998, %v1049
  %v1069 = vadd.f32 %v999, %v1049
  %v1070 = vadd.f32 %v1000, %v1049
  %v1071 = vadd.f32 %v1001, %v1049
  %v1072 = vadd.f32 %v1002, %v1049
  %v1073 = vadd.f32 %v1003, %v1049
  %v1074 = vadd.f32 %v1004, %v1049
  %v1075 = vadd.f32 %v1005, %v1049
  %v1076 = vadd.f32 %v1006, %v1049
  %v1077 = vadd.f32 %v1007, %v1049
  %v1078 = vadd.f32 %v1008, %v1049
  %v1079 = vadd.f32 %v1009, %v1049
  %v1080 = vadd.f32 %v1010, %v1049
  %v1081 = vadd.f32 %v1011, %v1049
  %v1082 = vadd.f32 %v1012, %v1049
  %v1083 = vadd.f32 %v1013, %v1049
  %v1084 = vadd.f32 %v1014, %v1049
  %v1085 = vadd.f32 %v1015, %v1049
  %v1086 = vadd.f32 %v1016, %v1049
  %v1087 = vadd.f32 %v1017, %v1049
  %v1088 = vadd.f32 %v1018, %v1049
  %v1089 = vadd.f32 %v1019, %v1049
  %v1090 = vadd.f32 %v1020, %v1049
  %v1091 = vadd.f32 %v1021, %v1049
  %v1092 = vadd.f32 %v1022, %v1049
  %v1093 = vadd.f32 %v1023, %v1049
  %v1094 = vadd.f32 %v1024, %v1049
  %v1095 = vadd.f32 %v1025, %v1049
  %v1096 = vadd.f32 %v1026, %v1049
  %v1097 = vadd.f32 %v1027, %v1049
  %v1098 = vadd.f32 %v1028, %v1049
  %v1099 = vadd.f32 %v1029, %v1049
  %v1100 = vadd.f32 %v1030, %v1049
  %v1101 = vadd.f32 %v1031, %v1049
  %v1102 = vadd.f32 %v1032, %v1049
  %v1103 = vadd.f32 %v1033, %v1049
  %v1104 = vadd.f32 %v1034, %v1049
  %v1105 = vadd.f32 %v1035, %v1049
  %v1106 = vadd.f32 %v1036, %v1049
  %v1107 = vadd.f32 %v1037, %v1049
  %v1108 = vadd.f32 %v1038, %v1049
  %v1109 = vadd.f32 %v1039, %v1049
  %v1110 = vadd.f32 %v1040, %v1049
  %v1111 = vadd.f32 %v1041, %v1049
  %v1112 = vadd.f32 %v1042, %v1049
  %v1113 = vadd.f32 %v1043, %v1049
  %v1114 = vadd.f32 %v1044, %v1049
  %v1115 = vmax.f32 %v1051, 0.0
  %v1116 = vmax.f32 %v1052, 0.0
  %v1117 = vmax.f32 %v1053, 0.0
  %v1118 = vmax.f32 %v1054, 0.0
  %v1119 = vmax.f32 %v1055, 0.0
  %v1120 = vmax.f32 %v1056, 0.0
  %v1121 = vmax.f32 %v1057, 0.0
  %v1122 = vmax.f32 %v1058, 0.0
  %v1123 = vmax.f32 %v1059, 0.0
  %v1124 = vmax.f32 %v1060, 0.0
  %v1125 = vmax.f32 %v1061, 0.0
  %v1126 = vmax.f32 %v1062, 0.0
  %v1127 = vmax.f32 %v1063, 0.0
  %v1128 = vmax.f32 %v1064, 0.0
  %v1129 = vmax.f32 %v1065, 0.0
  %v1130 = vmax.f32 %v1066, 0.0
  %v1131 = vmax.f32 %v1067, 0.0
  %v1132 = vmax.f32 %v1068, 0.0
  %v1133 = vmax.f32 %v1069, 0.0
  %v1134 = vmax.f32 %v1070, 0.0
  %v1135 = vmax.f32 %v1071, 0.0
  %v1136 = vmax.f32 %v1072, 0.0
  %v1137 = vmax.f32 %v1073, 0.0
  %v1138 = vmax.f32 %v1074, 0.0
  %v1139 = vmax.f32 %v1075, 0.0
  %v1140 = vmax.f32 %v1076, 0.0
  %v1141 = vmax.f32 %v1077, 0.0
  %v1142 = vmax.f32 %v1078, 0.0
  %v1143 = vmax.f32 %v1079, 0.0
  %v1144 = vmax.f32 %v1080, 0.0
  %v1145 = vmax.f32 %v1081, 0.0
  %v1146 = vmax.f32 %v1082, 0.0
  %v1147 = vmax.f32 %v1083, 0.0
  %v1148 = vmax.f32 %v1084, 0.0
  %v1149 = vmax.f32 %v1085, 0.0
  %v1150 = vmax.f32 %v1086, 0.0
  %v1151 = vmax.f32 %v1087, 0.0
  %v1152 = vmax.f32 %v1088, 0.0
  %v1153 = vmax.f32 %v1089, 0.0
  %v1154 = vmax.f32 %v1090, 0.0
  %v1155 = vmax.f32 %v1091, 0.0
  %v1156 = vmax.f32 %v1092, 0.0
  %v1157 = vmax.f32 %v1093, 0.0
  %v1158 = vmax.f32 %v1094, 0.0
  %v1159 = vmax.f32 %v1095, 0.0
  %v1160 = vmax.f32 %v1096, 0.0
  %v1161 = vmax.f32 %v1097, 0.0
  %v1162 = vmax.f32 %v1098, 0.0
  %v1163 = vmax.f32 %v1099, 0.0
  %v1164 = vmax.f32 %v1100, 0.0
  %v1165 = vmax.f32 %v1101, 0.0
  %v1166 = vmax.f32 %v1102, 0.0
  %v1167 = vmax.f32 %v1103, 0.0
  %v1168 = vmax.f32 %v1104, 0.0
  %v1169 = vmax.f32 %v1105, 0.0
  %v1170 = vmax.f32 %v1106, 0.0
  %v1171 = vmax.f32 %v1107, 0.0
  %v1172 = vmax.f32 %v1108, 0.0
  %v1173 = vmax.f32 %v1109, 0.0
  %v1174 = vmax.f32 %v1110, 0.0
  %v1175 = vmax.f32 %v1111, 0.0
  %v1176 = vmax.f32 %v1112, 0.0
  %v1177 = vmax.f32 %v1113, 0.0
  %v1178 = vmax.f32 %v1114, 0.0
  %1179 = vst.msk [vmem:[%s4] sm:$0xff] %vm510, %v1115
  %1180 = vst.msk [vmem:[%s4 + $0x8] sm:$0xff] %vm510, %v1116
  %1181 = vst.msk [vmem:[%s4 + $0x10] sm:$0xff] %vm510, %v1117
  %1182 = vst.msk [vmem:[%s4 + $0x18] sm:$0xff] %vm510, %v1118
  %1183 = vst.msk [vmem:[%s4 + $0x20] sm:$0xff] %vm510, %v1119
  %1184 = vst.msk [vmem:[%s4 + $0x28] sm:$0xff] %vm510, %v1120
  %1185 = vst.msk [vmem:[%s4 + $0x30] sm:$0xff] %vm510, %v1121
  %1186 = vst.msk [vmem:[%s4 + $0x38] sm:$0xff] %vm510, %v1122
  %1187 = vst.msk [vmem:[%s4 + $0x40] sm:$0xff] %vm510, %v1123
  %1188 = vst.msk [vmem:[%s4 + $0x48] sm:$0xff] %vm510, %v1124
  %1189 = vst.msk [vmem:[%s4 + $0x50] sm:$0xff] %vm510, %v1125
  %1190 = vst.msk [vmem:[%s4 + $0x58] sm:$0xff] %vm510, %v1126
  %1191 = vst.msk [vmem:[%s4 + $0x60] sm:$0xff] %vm510, %v1127
  %1192 = vst.msk [vmem:[%s4 + $0x68] sm:$0xff] %vm510, %v1128
  %1193 = vst.msk [vmem:[%s4 + $0x70] sm:$0xff] %vm510, %v1129
  %1194 = vst.msk [vmem:[%s4 + $0x78] sm:$0xff] %vm510, %v1130
  %1195 = vst.msk [vmem:[%s4 + $0x80] sm:$0xff] %vm510, %v1131
  %1196 = vst.msk [vmem:[%s4 + $0x88] sm:$0xff] %vm510, %v1132
  %1197 = vst.msk [vmem:[%s4 + $0x90] sm:$0xff] %vm510, %v1133
  %1198 = vst.msk [vmem:[%s4 + $0x98] sm:$0xff] %vm510, %v1134
  %1199 = vst.msk [vmem:[%s4 + $0xa0] sm:$0xff] %vm510, %v1135
  %1200 = vst.msk [vmem:[%s4 + $0xa8] sm:$0xff] %vm510, %v1136
  %1201 = vst.msk [vmem:[%s4 + $0xb0] sm:$0xff] %vm510, %v1137
  %1202 = vst.msk [vmem:[%s4 + $0xb8] sm:$0xff] %vm510, %v1138
  %1203 = vst.msk [vmem:[%s4 + $0xc0] sm:$0xff] %vm510, %v1139
  %1204 = vst.msk [vmem:[%s4 + $0xc8] sm:$0xff] %vm510, %v1140
  %1205 = vst.msk [vmem:[%s4 + $0xd0] sm:$0xff] %vm510, %v1141
  %1206 = vst.msk [vmem:[%s4 + $0xd8] sm:$0xff] %vm510, %v1142
  %1207 = vst.msk [vmem:[%s4 + $0xe0] sm:$0xff] %vm510, %v1143
  %1208 = vst.msk [vmem:[%s4 + $0xe8] sm:$0xff] %vm510, %v1144
  %1209 = vst.msk [vmem:[%s4 + $0xf0] sm:$0xff] %vm510, %v1145
  %1210 = vst.msk [vmem:[%s4 + $0xf8] sm:$0xff] %vm510, %v1146
  %1211 = vst.msk [vmem:[%s4 + $0x100] sm:$0xff] %vm510, %v1147
  %1212 = vst.msk [vmem:[%s4 + $0x108] sm:$0xff] %vm510, %v1148
  %1213 = vst.msk [vmem:[%s4 + $0x110] sm:$0xff] %vm510, %v1149
  %1214 = vst.msk [vmem:[%s4 + $0x118] sm:$0xff] %vm510, %v1150
  %1215 = vst.msk [vmem:[%s4 + $0x120] sm:$0xff] %vm510, %v1151
  %1216 = vst.msk [vmem:[%s4 + $0x128] sm:$0xff] %vm510, %v1152
  %1217 = vst.msk [vmem:[%s4 + $0x130] sm:$0xff] %vm510, %v1153
  %1218 = vst.msk [vmem:[%s4 + $0x138] sm:$0xff] %vm510, %v1154
  %1219 = vst.msk [vmem:[%s4 + $0x140] sm:$0xff] %vm510, %v1155
  %1220 = vst.msk [vmem:[%s4 + $0x148] sm:$0xff] %vm510, %v1156
  %1221 = vst.msk [vmem:[%s4 + $0x150] sm:$0xff] %vm510, %v1157
  %1222 = vst.msk [vmem:[%s4 + $0x158] sm:$0xff] %vm510, %v1158
  %1223 = vst.msk [vmem:[%s4 + $0x160] sm:$0xff] %vm510, %v1159
  %1224 = vst.msk [vmem:[%s4 + $0x168] sm:$0xff] %vm510, %v1160
  %1225 = vst.msk [vmem:[%s4 + $0x170] sm:$0xff] %vm510, %v1161
  %1226 = vst.msk [vmem:[%s4 + $0x178] sm:$0xff] %vm510, %v1162
  %1227 = vst.msk [vmem:[%s4 + $0x180] sm:$0xff] %vm510, %v1163
  %1228 = vst.msk [vmem:[%s4 + $0x188] sm:$0xff] %vm510, %v1164
  %1229 = vst.msk [vmem:[%s4 + $0x190] sm:$0xff] %vm510, %v1165
  %1230 = vst.msk [vmem:[%s4 + $0x198] sm:$0xff] %vm510, %v1166
  %1231 = vst.msk [vmem:[%s4 + $0x1a0] sm:$0xff] %vm510, %v1167
  %1232 = vst.msk [vmem:[%s4 + $0x1a8] sm:$0xff] %vm510, %v1168
  %1233 = vst.msk [vmem:[%s4 + $0x1b0] sm:$0xff] %vm510, %v1169
  %1234 = vst.msk [vmem:[%s4 + $0x1b8] sm:$0xff] %vm510, %v1170
  %1235 = vst.msk [vmem:[%s4 + $0x1c0] sm:$0xff] %vm510, %v1171
  %1236 = vst.msk [vmem:[%s4 + $0x1c8] sm:$0xff] %vm510, %v1172
  %1237 = vst.msk [vmem:[%s4 + $0x1d0] sm:$0xff] %vm510, %v1173
  %1238 = vst.msk [vmem:[%s4 + $0x1d8] sm:$0xff] %vm510, %v1174
  %1239 = vst.msk [vmem:[%s4 + $0x1e0] sm:$0xff] %vm510, %v1175
  %1240 = vst.msk [vmem:[%s4 + $0x1e8] sm:$0xff] %vm510, %v1176
  %1241 = vst.msk [vmem:[%s4 + $0x1f0] sm:$0xff] %vm510, %v1177
  %1242 = vst.msk [vmem:[%s4 + $0x1f8] sm:$0xff] %vm510, %v1178
  // Predicated region
  $region18: #{tpu_custom_call.1} parent=0 // pred_check
    _
  $region19: #{tpu_custom_call.1} parent=0 // pred_check_branch
    %1244 = sbr.rel (0) target = $region21
  $region20: #{tpu_custom_call.1} parent=0 // pred_region
    _
  $region21: #{tpu_custom_call.1} parent=0 // pred_fallthru
    _
  // Predicated region
  $region22: #{tpu_custom_call.1} parent=0 // pred_check
    _
  $region23: #{tpu_custom_call.1} parent=0 // pred_check_branch
    %1246 = sbr.rel (0) target = $region25
  $region24: #{tpu_custom_call.1} parent=0 // pred_region
    _
  $region25: #{tpu_custom_call.1} parent=0 // pred_fallthru
    _

</llo_original>
